<compile_context>
chip_gen: v7x
topology: tpu7x:2x2x1
jax: 0.10.0
libtpu: 0.0.40
codegen_flags: <defaults>
</compile_context>

<pallas_src>
import functools

import jax
import jax.numpy as jnp
from jax.experimental import pallas as pl
from jax.experimental.pallas import tpu as pltpu

_LANE = 128


def _largest_divisor_leq(n, cap):
    """Largest divisor of n that is <= cap (>= 1)."""
    cap = max(1, min(n, cap))
    for d in range(cap, 0, -1):
        if n % d == 0:
            return d
    return 1


def _make_lal_kernel(sub, n_sub):
    """Kernel factory: one (batch, spatial-tile) block of the fused pipe.

    x_ref : (Cin, TS)     f32 pixels, spatial on lanes (cast to bf16 in-kernel)
    wK_ref: (CoutK, CinK) bf16 BN-folded conv weight   (w' = scale * w)
    b_ref : (3, Cout, 1)  f32 BN-folded biases         (b' = (b - mean)*scale + beta)
    o_ref : (Cout, TS)    out_dtype
    """

    def kernel(x_ref, w1_ref, w2_ref, w3_ref, b_ref, o_ref):
        w1 = w1_ref[...]
        w2 = w2_ref[...]
        w3 = w3_ref[...]
        b1 = b_ref[0]
        b2 = b_ref[1]
        b3 = b_ref[2]

        def chain(x_f32):
            # stage 1: conv1x1 (+folded BN) + ReLU  (bf16 cast happens here,
            # not on the host -> no extra HBM pre-pass)
            h = jnp.dot(w1, x_f32.astype(jnp.bfloat16),
                        preferred_element_type=jnp.float32)
            h = jnp.maximum(h + b1, 0.0)
            # stage 2: conv1x1 (+folded BN) + ReLU
            h = jnp.dot(w2, h.astype(jnp.bfloat16),
                        preferred_element_type=jnp.float32)
            h = jnp.maximum(h + b2, 0.0)
            # stage 3: conv1x1 (+folded BN), no ReLU
            h = jnp.dot(w3, h.astype(jnp.bfloat16),
                        preferred_element_type=jnp.float32)
            return (h + b3).astype(o_ref.dtype)

        if n_sub == 1:
            o_ref[...] = chain(x_ref[...])
        else:
            # Sub-chunk the tile so the 3-stage intermediate chain stays in
            # vregs (avoids VMEM spills / vst-slot pressure at large tiles).
            @pl.loop(0, n_sub)
            def _(i):
                s = pl.multiple_of(i * sub, _LANE)
                o_ref[:, pl.ds(s, sub)] = chain(x_ref[:, pl.ds(s, sub)])

    return kernel


def location_adaptive_learner(x_nchw, params, nclass, *,
                              out_dtype=jnp.float32,
                              eps=1e-5,
                              max_tile_lanes=65536,
                              vmem_budget_bytes=12 * (1 << 20)):
    """Fused Pallas forward.

    x_nchw: (N, Cin, H, W) float32
    params: dict with w{k}, b{k}, g{k}, beta{k}, mean{k}, var{k} for k in 1..3
    Returns: (N, nclass, Cout // nclass, H, W) in out_dtype
    """
    N, Cin, H, W = x_nchw.shape
    Cout = params["w1"].shape[0]
    hw = H * W

    # ---- fold conv bias + BN (inference running stats) into weight / bias ----
    def fold(stage):
        w = params[f"w{stage}"]
        b = params[f"b{stage}"]
        g = params[f"g{stage}"]
        beta = params[f"beta{stage}"]
        mean = params[f"mean{stage}"]
        var = params[f"var{stage}"]
        scale = g / jnp.sqrt(var + eps)                 # per output channel
        w_f = (w * scale[:, None]).astype(jnp.bfloat16)  # bf16 for MXU
        b_f = (b - mean) * scale + beta                 # keep f32
        return w_f, b_f

    w1, b1 = fold(1)
    w2, b2 = fold(2)
    w3, b3 = fold(3)
    bias = jnp.stack([b1, b2, b3]).reshape(3, Cout, 1).astype(jnp.float32)

    # ---- channels-first, spatial flattened to lanes (zero-copy reshape) ----
    x_cf = x_nchw.reshape(N, Cin, hw)                   # stays f32

    # Pad spatial only to the next multiple of 128 lanes (<=127 extra elems);
    # no pad at all when hw is already lane-aligned.
    hw_pad = -(-hw // _LANE) * _LANE
    if hw_pad != hw:
        x_cf = jnp.pad(x_cf, ((0, 0), (0, 0), (0, hw_pad - hw)))
    n128 = hw_pad // _LANE

    # ---- tile sizing: biggest divisor of hw_pad that fits the VMEM budget ----
    out_bytes = jnp.dtype(out_dtype).itemsize
    # double-buffered f32 input block + out block per lane
    bytes_per_lane = 2 * (Cin * 4 + Cout * out_bytes)
    max_k = max(1, min(vmem_budget_bytes // (bytes_per_lane * _LANE),
                       max_tile_lanes // _LANE))
    k = _largest_divisor_leq(n128, max_k)
    # When N == 1, force >=2 spatial tiles (if possible) so both v7x TCs work.
    if N == 1 and n128 >= 2 and k == n128:
        k = _largest_divisor_leq(n128, n128 // 2)
    tile_s = _LANE * k

    # Inner sub-chunk (<=1024 lanes) keeping intermediates in vregs.
    sub_k = _largest_divisor_leq(k, 8)
    sub = _LANE * sub_k
    n_sub = tile_s // sub

    grid = (N, hw_pad // tile_s)

    x_spec = pl.BlockSpec((None, Cin, tile_s), lambda b, s: (b, 0, s))
    out_spec = pl.BlockSpec((None, Cout, tile_s), lambda b, s: (b, 0, s))

    def full_spec(a):
        return pl.BlockSpec(a.shape, lambda b, s: (0,) * a.ndim)

    flops = 2 * N * hw * (Cin * Cout + 2 * Cout * Cout)
    bytes_accessed = (
        N * hw_pad * Cin * 4              # f32 activations in
        + N * hw_pad * Cout * out_bytes   # out
        + (w1.size + w2.size + w3.size) * 2
        + bias.size * 4
    )

    out_cf = pl.pallas_call(
        _make_lal_kernel(sub, n_sub),
        out_shape=jax.ShapeDtypeStruct((N, Cout, hw_pad), out_dtype),
        grid=grid,
        in_specs=[x_spec, full_spec(w1), full_spec(w2), full_spec(w3),
                  full_spec(bias)],
        out_specs=out_spec,
        compiler_params=pltpu.CompilerParams(
            dimension_semantics=("parallel", "parallel")),
        cost_estimate=pl.CostEstimate(
            flops=flops, transcendentals=0, bytes_accessed=bytes_accessed),
    )(x_cf, w1, w2, w3, bias)

    if hw_pad != hw:
        out_cf = out_cf[:, :, :hw]

    # zero-copy view: (N, Cout, H*W) -> (N, nclass, Cout // nclass, H, W)
    return out_cf.reshape(N, nclass, Cout // nclass, H, W)


def make_params(key, in_channels, out_channels):
    """Deterministic parameter init (same shapes as the PyTorch module)."""
    ks = jax.random.split(key, 12)
    p = {}
    dims = [(out_channels, in_channels),
            (out_channels, out_channels),
            (out_channels, out_channels)]
    for i, (co, ci) in enumerate(dims, start=1):
        p[f"w{i}"] = 0.1 * jax.random.normal(ks[4 * (i - 1) + 0], (co, ci), jnp.float32)
        p[f"b{i}"] = 0.05 * jax.random.normal(ks[4 * (i - 1) + 1], (co,), jnp.float32)
        p[f"g{i}"] = 1.0 + 0.1 * jax.random.normal(ks[4 * (i - 1) + 2], (co,), jnp.float32)
        p[f"beta{i}"] = 0.1 * jax.random.normal(ks[4 * (i - 1) + 3], (co,), jnp.float32)
        # BN running stats (inference semantics); deterministic non-trivial values
        p[f"mean{i}"] = 0.01 * jnp.arange(co, dtype=jnp.float32)
        p[f"var{i}"] = 1.0 + 0.02 * jnp.arange(co, dtype=jnp.float32)
    return p


def _reference(x, params, nclass, eps=1e-5):
    """Pure-JAX f32 reference (conv1x1 + BN running stats + ReLU) x3."""
    N, Cin, H, W = x.shape
    h = x.reshape(N, Cin, H * W)
    for k in (1, 2, 3):
        w, b = params[f"w{k}"], params[f"b{k}"]
        g, beta = params[f"g{k}"], params[f"beta{k}"]
        mean, var = params[f"mean{k}"], params[f"var{k}"]
        h = jnp.einsum("oc,ncs->nos", w, h) + b[None, :, None]
        h = ((h - mean[None, :, None]) * (g / jnp.sqrt(var + eps))[None, :, None]
             + beta[None, :, None])
        if k < 3:
            h = jnp.maximum(h, 0.0)
    Cout = params["w3"].shape[0]
    return h.reshape(N, nclass, Cout // nclass, H, W)


if __name__ == "__main__":
    # Shapes consistent with DFF usage: in_channels = out_channels = nclass * 4
    nclass = 4
    in_channels = nclass * 4     # 16
    out_channels = nclass * 4    # 16
    N, H, W = 2, 16, 16

    key = jax.random.PRNGKey(0)
    k_x, k_p = jax.random.split(key)
    x = jax.random.normal(k_x, (N, in_channels, H, W), jnp.float32)
    params = make_params(k_p, in_channels, out_channels)

    fn = jax.jit(functools.partial(location_adaptive_learner, nclass=nclass))
    y = jax.block_until_ready(fn(x, params))

    assert y.shape == (N, nclass, out_channels // nclass, H, W), y.shape
    # bf16 weights / inter-stage activations vs. f32 reference -> loose tol
    y_ref = _reference(x, params, nclass)
    assert jnp.allclose(y.astype(jnp.float32), y_ref, rtol=0.1, atol=0.1), (
        float(jnp.max(jnp.abs(y.astype(jnp.float32) - y_ref))))
    print("KERNEL_OK")
</pallas_src>

<mosaic_0001>
module attributes {stable_mosaic.version = 11 : i64} {
  func.func @kernel(%arg0: i32, %arg1: i32, %arg2: memref<1x16x256xf32, #tpu.memory_space<vmem>>, %arg3: memref<16x16xbf16, #tpu.memory_space<vmem>>, %arg4: memref<16x16xbf16, #tpu.memory_space<vmem>>, %arg5: memref<16x16xbf16, #tpu.memory_space<vmem>>, %arg6: memref<3x16x1xf32, #tpu.memory_space<vmem>>, %arg7: memref<1x16x256xf32, #tpu.memory_space<vmem>>) attributes {dimension_semantics = [#tpu.dimension_semantics<parallel>, #tpu.dimension_semantics<parallel>], iteration_bounds = array<i64: 2, 1>, scalar_prefetch = 0 : i64, scratch_operands = 0 : i64, tpu.core_type = #tpu.core_type<tc>, window_params = [{transform_indices = @transform_0, window_bounds = array<i64: 1, 16, 256>}, {pipeline_mode = #tpu.pipeline_mode<synchronous>, transform_indices = @transform_1, window_bounds = array<i64: 16, 16>}, {pipeline_mode = #tpu.pipeline_mode<synchronous>, transform_indices = @transform_2, window_bounds = array<i64: 16, 16>}, {pipeline_mode = #tpu.pipeline_mode<synchronous>, transform_indices = @transform_3, window_bounds = array<i64: 16, 16>}, {pipeline_mode = #tpu.pipeline_mode<synchronous>, transform_indices = @transform_4, window_bounds = array<i64: 3, 16, 1>}, {transform_indices = @transform_5, window_bounds = array<i64: 1, 16, 256>}]} {
    %c0 = arith.constant 0 : index
    %c0_0 = arith.constant 0 : index
    %0 = vector.load %arg3[%c0, %c0_0] : memref<16x16xbf16, #tpu.memory_space<vmem>>, vector<16x16xbf16>
    %c0_1 = arith.constant 0 : index
    %c0_2 = arith.constant 0 : index
    %1 = vector.load %arg4[%c0_1, %c0_2] : memref<16x16xbf16, #tpu.memory_space<vmem>>, vector<16x16xbf16>
    %c0_3 = arith.constant 0 : index
    %c0_4 = arith.constant 0 : index
    %2 = vector.load %arg5[%c0_3, %c0_4] : memref<16x16xbf16, #tpu.memory_space<vmem>>, vector<16x16xbf16>
    %c0_5 = arith.constant 0 : index
    %c0_6 = arith.constant 0 : index
    %c0_7 = arith.constant 0 : index
    %3 = vector.load %arg6[%c0_5, %c0_6, %c0_7] : memref<3x16x1xf32, #tpu.memory_space<vmem>>, vector<1x16x1xf32>
    %4 = vector.shape_cast %3 : vector<1x16x1xf32> to vector<16x1xf32>
    %c1 = arith.constant 1 : index
    %c0_8 = arith.constant 0 : index
    %c0_9 = arith.constant 0 : index
    %5 = vector.load %arg6[%c1, %c0_8, %c0_9] : memref<3x16x1xf32, #tpu.memory_space<vmem>>, vector<1x16x1xf32>
    %6 = vector.shape_cast %5 : vector<1x16x1xf32> to vector<16x1xf32>
    %c2 = arith.constant 2 : index
    %c0_10 = arith.constant 0 : index
    %c0_11 = arith.constant 0 : index
    %7 = vector.load %arg6[%c2, %c0_10, %c0_11] : memref<3x16x1xf32, #tpu.memory_space<vmem>>, vector<1x16x1xf32>
    %8 = vector.shape_cast %7 : vector<1x16x1xf32> to vector<16x1xf32>
    %c0_12 = arith.constant 0 : index
    %c0_13 = arith.constant 0 : index
    %c0_14 = arith.constant 0 : index
    %9 = vector.load %arg2[%c0_12, %c0_13, %c0_14] : memref<1x16x256xf32, #tpu.memory_space<vmem>>, vector<1x16x256xf32>
    %10 = vector.shape_cast %9 : vector<1x16x256xf32> to vector<16x256xf32>
    %11 = arith.truncf %10 : vector<16x256xf32> to vector<16x256xbf16>
    %cst = arith.constant dense<0.000000e+00> : vector<16x256xf32>
    %12 = tpu.matmul %0, %11, %cst {dimension_numbers = #tpu.dot_dimension_numbers<[1], [0], [0], [1], [0, 0, 1, 1], [], []>} : vector<16x16xbf16>, vector<16x256xbf16>, vector<16x256xf32> -> vector<16x256xf32>
    %13 = vector.broadcast %4 : vector<16x1xf32> to vector<16x256xf32>
    %14 = arith.addf %12, %13 : vector<16x256xf32>
    %cst_15 = arith.constant 0.000000e+00 : f32
    %15 = vector.broadcast %cst_15 : f32 to vector<16x256xf32>
    %16 = arith.maximumf %14, %15 : vector<16x256xf32>
    %17 = arith.truncf %16 : vector<16x256xf32> to vector<16x256xbf16>
    %cst_16 = arith.constant dense<0.000000e+00> : vector<16x256xf32>
    %18 = tpu.matmul %1, %17, %cst_16 {dimension_numbers = #tpu.dot_dimension_numbers<[1], [0], [0], [1], [0, 0, 1, 1], [], []>} : vector<16x16xbf16>, vector<16x256xbf16>, vector<16x256xf32> -> vector<16x256xf32>
    %19 = vector.broadcast %6 : vector<16x1xf32> to vector<16x256xf32>
    %20 = arith.addf %18, %19 : vector<16x256xf32>
    %cst_17 = arith.constant 0.000000e+00 : f32
    %21 = vector.broadcast %cst_17 : f32 to vector<16x256xf32>
    %22 = arith.maximumf %20, %21 : vector<16x256xf32>
    %23 = arith.truncf %22 : vector<16x256xf32> to vector<16x256xbf16>
    %cst_18 = arith.constant dense<0.000000e+00> : vector<16x256xf32>
    %24 = tpu.matmul %2, %23, %cst_18 {dimension_numbers = #tpu.dot_dimension_numbers<[1], [0], [0], [1], [0, 0, 1, 1], [], []>} : vector<16x16xbf16>, vector<16x256xbf16>, vector<16x256xf32> -> vector<16x256xf32>
    %25 = vector.broadcast %8 : vector<16x1xf32> to vector<16x256xf32>
    %26 = arith.addf %24, %25 : vector<16x256xf32>
    %c0_19 = arith.constant 0 : index
    %c0_20 = arith.constant 0 : index
    %c0_21 = arith.constant 0 : index
    %27 = vector.load %arg7[%c0_19, %c0_20, %c0_21] : memref<1x16x256xf32, #tpu.memory_space<vmem>>, vector<1x16x256xf32>
    %28 = vector.shape_cast %27 : vector<1x16x256xf32> to vector<16x256xf32>
    %29 = vector.shape_cast %26 : vector<16x256xf32> to vector<1x16x256xf32>
    tpu.vector_store %arg7[%c0_19, %c0_20, %c0_21], %29 {strides = array<i32>} : memref<1x16x256xf32, #tpu.memory_space<vmem>>, vector<1x16x256xf32>,
    return
  }
  func.func @transform_0(%arg0: i32, %arg1: i32) -> (i32, i32, i32) {
    %c0_i32 = arith.constant 0 : i32
    %c0_i32_0 = arith.constant 0 : i32
    return %arg0, %c0_i32, %arg1 : i32, i32, i32
  }
  func.func @transform_1(%arg0: i32, %arg1: i32) -> (i32, i32) {
    %c0_i32 = arith.constant 0 : i32
    %c0_i32_0 = arith.constant 0 : i32
    %c0_i32_1 = arith.constant 0 : i32
    return %c0_i32, %c0_i32_0 : i32, i32
  }
  func.func @transform_2(%arg0: i32, %arg1: i32) -> (i32, i32) {
    %c0_i32 = arith.constant 0 : i32
    %c0_i32_0 = arith.constant 0 : i32
    %c0_i32_1 = arith.constant 0 : i32
    return %c0_i32, %c0_i32_0 : i32, i32
  }
  func.func @transform_3(%arg0: i32, %arg1: i32) -> (i32, i32) {
    %c0_i32 = arith.constant 0 : i32
    %c0_i32_0 = arith.constant 0 : i32
    %c0_i32_1 = arith.constant 0 : i32
    return %c0_i32, %c0_i32_0 : i32, i32
  }
  func.func @transform_4(%arg0: i32, %arg1: i32) -> (i32, i32, i32) {
    %c0_i32 = arith.constant 0 : i32
    %c0_i32_0 = arith.constant 0 : i32
    %c0_i32_1 = arith.constant 0 : i32
    %c0_i32_2 = arith.constant 0 : i32
    return %c0_i32, %c0_i32_0, %c0_i32_1 : i32, i32, i32
  }
  func.func @transform_5(%arg0: i32, %arg1: i32) -> (i32, i32, i32) {
    %c0_i32 = arith.constant 0 : i32
    %c0_i32_0 = arith.constant 0 : i32
    return %arg0, %c0_i32, %arg1 : i32, i32, i32
  }
}

</mosaic_0001>

<llo_original>
// kernel: location_adaptive_learner.1
$region0: #{location_adaptive_learner.1}
  #allocation0 [shape = 'u32[]', space=smem, size = 0x4, offset = 0x4, fixed_abs, tag = 'smem constant byte address 0x4 - core index']
  #allocation1 [shape = 'u32[144,128]{1,0:T(1,128)}', space=vmem, size = 0x12000, scoped, tag = 'internal scratch']
  %s0 = inlined_call_operand.vmem [shape: f32[2,16,256], index: 0, kind: input, shape index: {}]
  %s1 = inlined_call_operand.vmem [shape: bf16[16,16], index: 1, kind: input, shape index: {}]
  %s2 = inlined_call_operand.vmem [shape: bf16[16,16], index: 2, kind: input, shape index: {}]
  %s3 = inlined_call_operand.vmem [shape: bf16[16,16], index: 3, kind: input, shape index: {}]
  %s4 = inlined_call_operand.vmem [shape: f32[3,16,1], index: 4, kind: input, shape index: {}]
  %s5 = inlined_call_operand.vmem [shape: f32[2,16,256], index: 5, kind: output, shape index: {}]
  %s6 = sld [smem:[#allocation0]]
  $region53: #{location_adaptive_learner.1} parent=0
    _
  %s8 = ssub.s32 1, %s6
  %s9 = scalar_select 0, %s8, %s6
  loop: start=0, step=1, limit=4
  $region2: #{location_adaptive_learner.1} parent=0 // loop_pre_header
    _
  $region3: #{location_adaptive_learner.1} parent=0 // loop_header
    %s11 = sphi 0, %s15
    %p12 = scmp.ge.s32.totalorder %s11, 4
    %s18 = sphi 0, %s30
    %s19 = sphi 0, %s26
    %s20 = sphi 0, %s18
    %s21 = sphi 0, %s19
    %s22 = sphi 0, %s20
    %s23 = sphi 0, %s21
    %s35 = sphi 0, %s37
    %s38 = sphi 0, %s35
    %s39 = sphi 0, %s38
    %s55 = sphi 0, %s39
    %s59 = sphi 0, %s59
    %s61 = sphi 0, %s59
    %s62 = sphi 0, %s61
    %s76 = sphi 0, %s62
    %s80 = sphi 0, %s80
    %s82 = sphi 0, %s80
    %s83 = sphi 0, %s82
    %s97 = sphi 0, %s83
    %s101 = sphi 0, %s101
    %s103 = sphi 0, %s101
    %s104 = sphi 0, %s103
    %s118 = sphi 0, %s104
    %s122 = sphi 0, %s122
    %s124 = sphi 0, %s122
    %s125 = sphi 0, %s124
    %s139 = sphi 0, %s125
    %s147 = sphi 0, %s149
    %s150 = sphi 0, %s147
    %s151 = sphi 0, %s150
    %s167 = sphi 0, %s151
  $region4: #{location_adaptive_learner.1} parent=0 // loop_header_branch
    %14 = sbr.rel (%p12) target = $region8
  $region5: #{location_adaptive_learner.1} parent=0 // loop_body
    %s16 = ssub.s32 %s11, 1
    %s17 = ssub.s32 %s11, 2
    %s24 = sadd.s32 1, %s19
    %p25 = scmp.ge.s32.totalorder %s24, 1
    %s26 = scalar_select %p25, 0, %s24
    %s27 = sadd.s32 1, %s18
    %s28 = scalar_select %p25, %s27, %s18
    %p29 = scmp.ge.s32.totalorder %s28, 2
    %s30 = scalar_select %p29, 0, %s28
    %s31 = ssub.s32 %s18, %s30
    %s32 = ssub.s32 %s19, %s26
    %s33 = sor.u32 %s31, %s32
    %p34 = scmp.eq.s32.totalorder %s33, 0
    %s36 = sadd.s32 %s35, 1
    %s37 = scalar_select %p34, %s35, %s36
    %p40 = pneg %p34
    %p41 = scmp.eq.s32.totalorder %s11, 1
    %p42 = por %p40, %p41
    %p43 = scmp.ne.s32.totalorder %s35, %s38
    %p44 = scmp.eq.s32.totalorder %s11, 0
    %p45 = por %p43, %p44
    %p46 = scmp.ne.s32.totalorder %s35, %s38
    %p47 = scmp.eq.s32.totalorder %s16, 1
    %p48 = por %p46, %p47
    %p49 = scmp.ne.s32.totalorder %s38, %s39
    %p50 = scmp.eq.s32.totalorder %s16, 0
    %p51 = por %p49, %p50
    %p52 = scmp.ne.s32.totalorder %s38, %s39
    %p53 = scmp.eq.s32.totalorder %s17, 1
    %p54 = por %p52, %p53
    %p56 = scmp.ne.s32.totalorder %s39, %s55
    %p57 = scmp.eq.s32.totalorder %s17, 0
    %p58 = por %p56, %p57
    %s60 = sadd.s32 %s59, 1
    %p63 = scmp.eq.s32.totalorder %s11, 1
    %p64 = scmp.ne.s32.totalorder %s59, %s61
    %p65 = scmp.eq.s32.totalorder %s11, 0
    %p66 = por %p64, %p65
    %p67 = scmp.ne.s32.totalorder %s59, %s61
    %p68 = scmp.eq.s32.totalorder %s16, 1
    %p69 = por %p67, %p68
    %p70 = scmp.ne.s32.totalorder %s61, %s62
    %p71 = scmp.eq.s32.totalorder %s16, 0
    %p72 = por %p70, %p71
    %p73 = scmp.ne.s32.totalorder %s61, %s62
    %p74 = scmp.eq.s32.totalorder %s17, 1
    %p75 = por %p73, %p74
    %p77 = scmp.ne.s32.totalorder %s62, %s76
    %p78 = scmp.eq.s32.totalorder %s17, 0
    %p79 = por %p77, %p78
    %s81 = sadd.s32 %s80, 1
    %p84 = scmp.eq.s32.totalorder %s11, 1
    %p85 = scmp.ne.s32.totalorder %s80, %s82
    %p86 = scmp.eq.s32.totalorder %s11, 0
    %p87 = por %p85, %p86
    %p88 = scmp.ne.s32.totalorder %s80, %s82
    %p89 = scmp.eq.s32.totalorder %s16, 1
    %p90 = por %p88, %p89
    %p91 = scmp.ne.s32.totalorder %s82, %s83
    %p92 = scmp.eq.s32.totalorder %s16, 0
    %p93 = por %p91, %p92
    %p94 = scmp.ne.s32.totalorder %s82, %s83
    %p95 = scmp.eq.s32.totalorder %s17, 1
    %p96 = por %p94, %p95
    %p98 = scmp.ne.s32.totalorder %s83, %s97
    %p99 = scmp.eq.s32.totalorder %s17, 0
    %p100 = por %p98, %p99
    %s102 = sadd.s32 %s101, 1
    %p105 = scmp.eq.s32.totalorder %s11, 1
    %p106 = scmp.ne.s32.totalorder %s101, %s103
    %p107 = scmp.eq.s32.totalorder %s11, 0
    %p108 = por %p106, %p107
    %p109 = scmp.ne.s32.totalorder %s101, %s103
    %p110 = scmp.eq.s32.totalorder %s16, 1
    %p111 = por %p109, %p110
    %p112 = scmp.ne.s32.totalorder %s103, %s104
    %p113 = scmp.eq.s32.totalorder %s16, 0
    %p114 = por %p112, %p113
    %p115 = scmp.ne.s32.totalorder %s103, %s104
    %p116 = scmp.eq.s32.totalorder %s17, 1
    %p117 = por %p115, %p116
    %p119 = scmp.ne.s32.totalorder %s104, %s118
    %p120 = scmp.eq.s32.totalorder %s17, 0
    %p121 = por %p119, %p120
    %s123 = sadd.s32 %s122, 1
    %p126 = scmp.eq.s32.totalorder %s11, 1
    %p127 = scmp.ne.s32.totalorder %s122, %s124
    %p128 = scmp.eq.s32.totalorder %s11, 0
    %p129 = por %p127, %p128
    %p130 = scmp.ne.s32.totalorder %s122, %s124
    %p131 = scmp.eq.s32.totalorder %s16, 1
    %p132 = por %p130, %p131
    %p133 = scmp.ne.s32.totalorder %s124, %s125
    %p134 = scmp.eq.s32.totalorder %s16, 0
    %p135 = por %p133, %p134
    %p136 = scmp.ne.s32.totalorder %s124, %s125
    %p137 = scmp.eq.s32.totalorder %s17, 1
    %p138 = por %p136, %p137
    %p140 = scmp.ne.s32.totalorder %s125, %s139
    %p141 = scmp.eq.s32.totalorder %s17, 0
    %p142 = por %p140, %p141
    %s143 = ssub.s32 %s18, %s30
    %s144 = ssub.s32 %s19, %s26
    %s145 = sor.u32 %s143, %s144
    %p146 = scmp.eq.s32.totalorder %s145, 0
    %s148 = sadd.s32 %s147, 1
    %s149 = scalar_select %p146, %s147, %s148
    %p152 = pneg %p146
    %p153 = scmp.eq.s32.totalorder %s11, 1
    %p154 = por %p152, %p153
    %p155 = scmp.ne.s32.totalorder %s147, %s150
    %p156 = scmp.eq.s32.totalorder %s11, 0
    %p157 = por %p155, %p156
    %p158 = scmp.ne.s32.totalorder %s147, %s150
    %p159 = scmp.eq.s32.totalorder %s16, 1
    %p160 = por %p158, %p159
    %p161 = scmp.ne.s32.totalorder %s150, %s151
    %p162 = scmp.eq.s32.totalorder %s16, 0
    %p163 = por %p161, %p162
    %p164 = scmp.ne.s32.totalorder %s150, %s151
    %p165 = scmp.eq.s32.totalorder %s17, 1
    %p166 = por %p164, %p165
    %p168 = scmp.ne.s32.totalorder %s151, %s167
    %p169 = scmp.eq.s32.totalorder %s17, 0
    %p170 = por %p168, %p169
    %p171 = scmp.le.s32.totalorder 1, %s11
    %p172 = scmp.lt.s32.totalorder %s11, 3
    %p173 = pnand %p171, %p172
    %p174 = pneg %p173
    // Predicated region
    $region9: #{location_adaptive_learner.1} parent=5 // pred_check
      _
    $region10: #{location_adaptive_learner.1} parent=5 // pred_check_branch
      %176 = sbr.rel (%p173) target = $region12
    $region11: #{location_adaptive_learner.1} parent=5 // pred_region
      %s177 = ssub.s32 %s11, 1
      // Predicated region
      $region13: #{location_adaptive_learner.1} parent=11 // pred_check
        %p178 = pneg %p72
      $region14: #{location_adaptive_learner.1} parent=11 // pred_check_branch
        %180 = sbr.rel (%p178) target = $region16
      $region15: #{location_adaptive_learner.1} parent=11 // pred_region
        _
      $region16: #{location_adaptive_learner.1} parent=11 // pred_fallthru
        _
      // Predicated region
      $region17: #{location_adaptive_learner.1} parent=11 // pred_check
        %p181 = pneg %p93
      $region18: #{location_adaptive_learner.1} parent=11 // pred_check_branch
        %183 = sbr.rel (%p181) target = $region20
      $region19: #{location_adaptive_learner.1} parent=11 // pred_region
        _
      $region20: #{location_adaptive_learner.1} parent=11 // pred_fallthru
        _
      // Predicated region
      $region21: #{location_adaptive_learner.1} parent=11 // pred_check
        %p184 = pneg %p114
      $region22: #{location_adaptive_learner.1} parent=11 // pred_check_branch
        %186 = sbr.rel (%p184) target = $region24
      $region23: #{location_adaptive_learner.1} parent=11 // pred_region
        _
      $region24: #{location_adaptive_learner.1} parent=11 // pred_fallthru
        _
      // Predicated region
      $region25: #{location_adaptive_learner.1} parent=11 // pred_check
        %p187 = pneg %p135
      $region26: #{location_adaptive_learner.1} parent=11 // pred_check_branch
        %189 = sbr.rel (%p187) target = $region28
      $region27: #{location_adaptive_learner.1} parent=11 // pred_region
        _
      $region28: #{location_adaptive_learner.1} parent=11 // pred_fallthru
        _
    $region12: #{location_adaptive_learner.1} parent=5 // pred_fallthru
      _
    %p190 = scmp.lt.s32.totalorder %s11, 2
    // Predicated region
    $region29: #{location_adaptive_learner.1} parent=5 // pred_check
      %p191 = pneg %p190
    $region30: #{location_adaptive_learner.1} parent=5 // pred_check_branch
      %193 = sbr.rel (%p191) target = $region32
    $region31: #{location_adaptive_learner.1} parent=5 // pred_region
      // Predicated region
      $region33: #{location_adaptive_learner.1} parent=31 // pred_check
        %p194 = pneg %p45
      $region34: #{location_adaptive_learner.1} parent=31 // pred_check_branch
        %196 = sbr.rel (%p194) target = $region36
      $region35: #{location_adaptive_learner.1} parent=31 // pred_region
        %s197 = smul.u32 2, %s19
        %p198 = scmp.lt.s32.totalorder %s18, 1
        %s199 = scalar_select %p198, %s18, 1
        %p200 = scmp.lt.s32.totalorder %s197, 1
        %s201 = scalar_select %p200, %s197, 1
        %s202 = smul.addr %s199, 4
        %s203 = sadd.s32 %s201, %s202
        %s204 = smul.addr %s203, 8
        %s205 = scalar_lea.vmem %s0, %s204
        %s206 = smul.u32 2, %s19
      $region36: #{location_adaptive_learner.1} parent=31 // pred_fallthru
        _
    $region32: #{location_adaptive_learner.1} parent=5 // pred_fallthru
      _
    %p207 = scmp.le.s32.totalorder 1, %s11
    %p208 = scmp.lt.s32.totalorder %s11, 3
    %p209 = pnand %p207, %p208
    %p210 = pneg %p209
    // Predicated region
    $region37: #{location_adaptive_learner.1} parent=5 // pred_check
      _
    $region38: #{location_adaptive_learner.1} parent=5 // pred_check_branch
      %212 = sbr.rel (%p209) target = $region40
    $region39: #{location_adaptive_learner.1} parent=5 // pred_region
      %s213 = ssub.s32 %s11, 1
      %s214 = smul.u32 2, %s21
      %p215 = scmp.lt.s32.totalorder %s20, 1
      %s216 = scalar_select %p215, %s20, 1
      %p217 = scmp.lt.s32.totalorder %s214, 1
      %s218 = scalar_select %p217, %s214, 1
      %s219 = smul.addr %s216, 4
      %s220 = sadd.s32 %s218, %s219
      %s221 = smul.addr %s220, 8
      %s222 = scalar_lea.vmem %s0, %s221
      %p223 = pneg %p51
      %p224 = pneg %p48
      %p225 = pneg %p72
      %p226 = pneg %p69
      %p227 = pneg %p93
      %p228 = pneg %p90
      %p229 = pneg %p114
      %p230 = pneg %p111
      %p231 = pneg %p135
      %p232 = pneg %p132
      %p233 = pneg %p163
      %p234 = pneg %p160
      %s235 = smul.u32 2, %s21
      %p236 = scmp.lt.s32.totalorder %s20, 1
      %s237 = scalar_select %p236, %s20, 1
      %p238 = scmp.lt.s32.totalorder %s235, 1
      %s239 = scalar_select %p238, %s235, 1
      %s240 = smul.addr %s237, 4
      %s241 = sadd.s32 %s239, %s240
      %s242 = smul.addr %s241, 8
      %s243 = scalar_lea.vmem %s5, %s242
      %s244 = smul.u32 2, %s21
      %p245 = scmp.lt.s32.totalorder %s20, 1
      %s246 = scalar_select %p245, %s20, 1
      %p247 = scmp.lt.s32.totalorder %s244, 1
      %s248 = scalar_select %p247, %s244, 1
      %s249 = smul.addr %s246, 4
      %s250 = sadd.s32 %s248, %s249
      %s251 = smul.addr %s250, 8
      %s252 = scalar_lea.vmem %s0, %s251
      %s253 = smul.u32 2, %s21
      %s254 = smul.u32 2, %s21
      %p255 = scmp.lt.s32.totalorder %s20, 1
      %s256 = scalar_select %p255, %s20, 1
      %p257 = scmp.lt.s32.totalorder %s254, 1
      %s258 = scalar_select %p257, %s254, 1
      %s259 = smul.addr %s256, 4
      %s260 = sadd.s32 %s258, %s259
      %s261 = smul.addr %s260, 8
      %s262 = scalar_lea.vmem %s5, %s261
      %s263 = smul.u32 2, %s21
      %v265 = vld [vmem:[%s1] sm:$0xf]
      %v266 = vld [vmem:[%s1 + $0x4] sm:$0xf]
      %v267 = vld [vmem:[%s2] sm:$0xf]
      %v268 = vld [vmem:[%s2 + $0x4] sm:$0xf]
      %v269 = vld [vmem:[%s3] sm:$0xf]
      %v270 = vld [vmem:[%s3 + $0x4] sm:$0xf]
      %v271 = vld [vmem:[%s4] sm:$0xff]
      %v272 = vld [vmem:[%s4 + $0x8] sm:$0xff]
      %s273 = scalar_lea.vmem %s4, 16
      %v274 = vld [vmem:[%s273] sm:$0xff]
      %v275 = vld [vmem:[%s273 + $0x8] sm:$0xff]
      %s276 = scalar_lea.vmem %s4, 32
      %v277 = vld [vmem:[%s276] sm:$0xff]
      %v278 = vld [vmem:[%s276 + $0x8] sm:$0xff]
      %v279 = vld [vmem:[%s252] sm:$0xff]
      %v280 = vld [vmem:[%s252 + $0x8] sm:$0xff]
      %v281 = vld [vmem:[%s252 + $0x10] sm:$0xff]
      %v282 = vld [vmem:[%s252 + $0x18] sm:$0xff]
      %v283 = vpack.c.bf16 %v281, %v279
      %v284 = vpack.c.bf16 %v282, %v280
      %286 = vset.pattern.permute.xlu0 0
      %287 = vperm.xlu0 %286, %v271
      %v288 = vpop.permute.xlu0 %287
      %291 = vset.pattern.permute.xlu0 0
      %292 = vperm.xlu0 %291, %v272
      %v293 = vpop.permute.xlu0 %292
      %v297 = vunpack.c.l.b16 %v265
      %v298 = vunpack.c.l.b16 %v266
      %v299 = vpack.c.b16 %v298, %v297
      %vm300 = vcmask 130048
      %v302 = vsel %vm300, %v299, 0
      %304 = vmatprep.subr.bf16.mxu0 %v284
      %305 = vmatpush1.bf16.msra.mxu0 %v283
      %306 = vmatprep.subr.bf16.mxu0 0
      %307 = vmatpush1.bf16.msra.mxu0 0
      %308 = vmatprep.subr.bf16.mxu0 0
      %309 = vmatpush1.bf16.msra.mxu0 0
      %310 = vmatprep.subr.bf16.mxu0 0
      %311 = vmatpush1.bf16.msra.mxu0 0
      %312 = vmatprep.subr.bf16.mxu0 0
      %313 = vmatpush1.bf16.msra.mxu0 0
      %314 = vmatprep.subr.bf16.mxu0 0
      %315 = vmatpush1.bf16.msra.mxu0 0
      %316 = vmatprep.subr.bf16.mxu0 0
      %317 = vmatpush1.bf16.msra.mxu0 0
      %318 = vmatprep.subr.bf16.mxu0 0
      %319 = vmatpush1.bf16.msra.mxu0 0
      %320 = vmatprep.subr.bf16.mxu0 0
      %321 = vmatpush1.bf16.msra.mxu0 0
      %322 = vmatprep.subr.bf16.mxu0 0
      %323 = vmatpush1.bf16.msra.mxu0 0
      %324 = vmatprep.subr.bf16.mxu0 0
      %325 = vmatpush1.bf16.msra.mxu0 0
      %326 = vmatprep.subr.bf16.mxu0 0
      %327 = vmatpush1.bf16.msra.mxu0 0
      %328 = vmatprep.subr.bf16.mxu0 0
      %329 = vmatpush1.bf16.msra.mxu0 0
      %330 = vmatprep.subr.bf16.mxu0 0
      %331 = vmatpush1.bf16.msra.mxu0 0
      %332 = vmatprep.subr.bf16.mxu0 0
      %333 = vmatpush1.bf16.msra.mxu0 0
      %334 = vmatprep.subr.bf16.mxu0 0
      %335 = vmatpush1.bf16.msra.mxu0 0
      %336 = vmatprep.mubr.bf16.mxu0 0
      %337 = vmatmul.mubr.bf16.gmra.mrb[0].mxu0 %v302
      %v338 = vpop.f32.mrb[0].mxu0
      %v339 = vadd.f32 %v288, %v338
      %v340 = vpop.f32.mrb[0].mxu0
      %v341 = vadd.f32 %v288, %v340
      %v342 = vpop.f32.mrb[0].mxu0
      %v343 = vadd.f32 %v293, %v342
      %v344 = vpop.f32.mrb[0].mxu0
      %v345 = vadd.f32 %v293, %v344
      %346 = vdwg.mxu0
      %v347 = vmax.f32 %v339, 0.0
      %v348 = vmax.f32 %v341, 0.0
      %v349 = vmax.f32 %v343, 0.0
      %v350 = vmax.f32 %v345, 0.0
      %v351 = vpack.c.bf16 %v349, %v347
      %v352 = vpack.c.bf16 %v350, %v348
      %354 = vset.pattern.permute.xlu0 0
      %355 = vperm.xlu0 %354, %v274
      %v356 = vpop.permute.xlu0 %355
      %359 = vset.pattern.permute.xlu0 0
      %360 = vperm.xlu0 %359, %v275
      %v361 = vpop.permute.xlu0 %360
      %v365 = vunpack.c.l.b16 %v267
      %v366 = vunpack.c.l.b16 %v268
      %v367 = vpack.c.b16 %v366, %v365
      %v369 = vsel %vm300, %v367, 0
      %371 = vmatprep.subr.bf16.mxu0 %v352
      %372 = vmatpush1.bf16.msra.mxu0 %v351
      %373 = vmatprep.subr.bf16.mxu0 0
      %374 = vmatpush1.bf16.msra.mxu0 0
      %375 = vmatprep.subr.bf16.mxu0 0
      %376 = vmatpush1.bf16.msra.mxu0 0
      %377 = vmatprep.subr.bf16.mxu0 0
      %378 = vmatpush1.bf16.msra.mxu0 0
      %379 = vmatprep.subr.bf16.mxu0 0
      %380 = vmatpush1.bf16.msra.mxu0 0
      %381 = vmatprep.subr.bf16.mxu0 0
      %382 = vmatpush1.bf16.msra.mxu0 0
      %383 = vmatprep.subr.bf16.mxu0 0
      %384 = vmatpush1.bf16.msra.mxu0 0
      %385 = vmatprep.subr.bf16.mxu0 0
      %386 = vmatpush1.bf16.msra.mxu0 0
      %387 = vmatprep.subr.bf16.mxu0 0
      %388 = vmatpush1.bf16.msra.mxu0 0
      %389 = vmatprep.subr.bf16.mxu0 0
      %390 = vmatpush1.bf16.msra.mxu0 0
      %391 = vmatprep.subr.bf16.mxu0 0
      %392 = vmatpush1.bf16.msra.mxu0 0
      %393 = vmatprep.subr.bf16.mxu0 0
      %394 = vmatpush1.bf16.msra.mxu0 0
      %395 = vmatprep.subr.bf16.mxu0 0
      %396 = vmatpush1.bf16.msra.mxu0 0
      %397 = vmatprep.subr.bf16.mxu0 0
      %398 = vmatpush1.bf16.msra.mxu0 0
      %399 = vmatprep.subr.bf16.mxu0 0
      %400 = vmatpush1.bf16.msra.mxu0 0
      %401 = vmatprep.subr.bf16.mxu0 0
      %402 = vmatpush1.bf16.msra.mxu0 0
      %403 = vmatprep.mubr.bf16.mxu0 0
      %404 = vmatmul.mubr.bf16.gmra.mrb[0].mxu0 %v369
      %v405 = vpop.f32.mrb[0].mxu0
      %v406 = vadd.f32 %v356, %v405
      %v407 = vpop.f32.mrb[0].mxu0
      %v408 = vadd.f32 %v356, %v407
      %v409 = vpop.f32.mrb[0].mxu0
      %v410 = vadd.f32 %v361, %v409
      %v411 = vpop.f32.mrb[0].mxu0
      %v412 = vadd.f32 %v361, %v411
      %413 = vdwg.mxu0
      %v414 = vmax.f32 %v406, 0.0
      %v415 = vmax.f32 %v408, 0.0
      %v416 = vmax.f32 %v410, 0.0
      %v417 = vmax.f32 %v412, 0.0
      %v418 = vpack.c.bf16 %v416, %v414
      %v419 = vpack.c.bf16 %v417, %v415
      %421 = vset.pattern.permute.xlu0 0
      %422 = vperm.xlu0 %421, %v277
      %v423 = vpop.permute.xlu0 %422
      %426 = vset.pattern.permute.xlu0 0
      %427 = vperm.xlu0 %426, %v278
      %v428 = vpop.permute.xlu0 %427
      %v432 = vunpack.c.l.b16 %v269
      %v433 = vunpack.c.l.b16 %v270
      %v434 = vpack.c.b16 %v433, %v432
      %v436 = vsel %vm300, %v434, 0
      %438 = vmatprep.subr.bf16.mxu0 %v419
      %439 = vmatpush1.bf16.msra.mxu0 %v418
      %440 = vmatprep.subr.bf16.mxu0 0
      %441 = vmatpush1.bf16.msra.mxu0 0
      %442 = vmatprep.subr.bf16.mxu0 0
      %443 = vmatpush1.bf16.msra.mxu0 0
      %444 = vmatprep.subr.bf16.mxu0 0
      %445 = vmatpush1.bf16.msra.mxu0 0
      %446 = vmatprep.subr.bf16.mxu0 0
      %447 = vmatpush1.bf16.msra.mxu0 0
      %448 = vmatprep.subr.bf16.mxu0 0
      %449 = vmatpush1.bf16.msra.mxu0 0
      %450 = vmatprep.subr.bf16.mxu0 0
      %451 = vmatpush1.bf16.msra.mxu0 0
      %452 = vmatprep.subr.bf16.mxu0 0
      %453 = vmatpush1.bf16.msra.mxu0 0
      %454 = vmatprep.subr.bf16.mxu0 0
      %455 = vmatpush1.bf16.msra.mxu0 0
      %456 = vmatprep.subr.bf16.mxu0 0
      %457 = vmatpush1.bf16.msra.mxu0 0
      %458 = vmatprep.subr.bf16.mxu0 0
      %459 = vmatpush1.bf16.msra.mxu0 0
      %460 = vmatprep.subr.bf16.mxu0 0
      %461 = vmatpush1.bf16.msra.mxu0 0
      %462 = vmatprep.subr.bf16.mxu0 0
      %463 = vmatpush1.bf16.msra.mxu0 0
      %464 = vmatprep.subr.bf16.mxu0 0
      %465 = vmatpush1.bf16.msra.mxu0 0
      %466 = vmatprep.subr.bf16.mxu0 0
      %467 = vmatpush1.bf16.msra.mxu0 0
      %468 = vmatprep.subr.bf16.mxu0 0
      %469 = vmatpush1.bf16.msra.mxu0 0
      %470 = vmatprep.mubr.bf16.mxu0 0
      %471 = vmatmul.mubr.bf16.gmra.mrb[0].mxu0 %v436
      %v472 = vpop.f32.mrb[0].mxu0
      %v473 = vadd.f32 %v423, %v472
      %v474 = vpop.f32.mrb[0].mxu0
      %v475 = vadd.f32 %v423, %v474
      %v476 = vpop.f32.mrb[0].mxu0
      %v477 = vadd.f32 %v428, %v476
      %v478 = vpop.f32.mrb[0].mxu0
      %v479 = vadd.f32 %v428, %v478
      %480 = vdwg.mxu0
      %481 = vst [vmem:[%s262] sm:$0xff] %v473
      %482 = vst [vmem:[%s262 + $0x8] sm:$0xff] %v475
      %483 = vst [vmem:[%s262 + $0x10] sm:$0xff] %v477
      %484 = vst [vmem:[%s262 + $0x18] sm:$0xff] %v479
      %s485 = smul.u32 2, %s21
      %p486 = scmp.lt.s32.totalorder %s20, 1
      %s487 = scalar_select %p486, %s20, 1
      %p488 = scmp.lt.s32.totalorder %s485, 1
      %s489 = scalar_select %p488, %s485, 1
      %s490 = smul.addr %s487, 4
      %s491 = sadd.s32 %s489, %s490
      %s492 = smul.addr %s491, 8
      %s493 = scalar_lea.vmem %s5, %s492
      // Predicated region
      $region41: #{location_adaptive_learner.1} parent=39 // pred_check
        %p494 = pneg %p160
      $region42: #{location_adaptive_learner.1} parent=39 // pred_check_branch
        %496 = sbr.rel (%p494) target = $region44
      $region43: #{location_adaptive_learner.1} parent=39 // pred_region
        %s497 = smul.u32 2, %s21
      $region44: #{location_adaptive_learner.1} parent=39 // pred_fallthru
        _
    $region40: #{location_adaptive_learner.1} parent=5 // pred_fallthru
      _
    %p498 = scmp.le.s32.totalorder 2, %s11
    // Predicated region
    $region45: #{location_adaptive_learner.1} parent=5 // pred_check
      %p499 = pneg %p498
    $region46: #{location_adaptive_learner.1} parent=5 // pred_check_branch
      %501 = sbr.rel (%p499) target = $region48
    $region47: #{location_adaptive_learner.1} parent=5 // pred_region
      %s502 = ssub.s32 %s11, 2
      // Predicated region
      $region49: #{location_adaptive_learner.1} parent=47 // pred_check
        %p503 = pneg %p166
      $region50: #{location_adaptive_learner.1} parent=47 // pred_check_branch
        %505 = sbr.rel (%p503) target = $region52
      $region51: #{location_adaptive_learner.1} parent=47 // pred_region
        %s506 = smul.u32 2, %s23
        %p507 = scmp.lt.s32.totalorder %s22, 1
        %s508 = scalar_select %p507, %s22, 1
        %p509 = scmp.lt.s32.totalorder %s506, 1
        %s510 = scalar_select %p509, %s506, 1
        %s511 = smul.addr %s508, 4
        %s512 = sadd.s32 %s510, %s511
        %s513 = smul.addr %s512, 8
        %s514 = scalar_lea.vmem %s5, %s513
      $region52: #{location_adaptive_learner.1} parent=47 // pred_fallthru
        _
    $region48: #{location_adaptive_learner.1} parent=5 // pred_fallthru
      _
  $region6: #{location_adaptive_learner.1} parent=0 // loop_footer
    %s15 = sadd.s32 1, %s11
  $region7: #{location_adaptive_learner.1} parent=0 // loop_footer_branch
    %10 = sbr.rel target = $region3
  $region8: #{location_adaptive_learner.1} parent=0 // loop_exit
    _

</llo_original>
